<compile_context>
chip_gen: v5e
topology: v5e:2x2
jax: 0.10.0
libtpu: 0.0.40
codegen_flags: <defaults>
</compile_context>

<pallas_src>
import functools

import jax
import jax.numpy as jnp
from jax.experimental import pallas as pl
from jax.experimental.pallas import tpu as pltpu


def vae_forward_kernel(
    x_ref, eps_ref,
    w_in_ref, w_musig_ref, w_lt_ref, w_out_ref,
    bias_ref,
    xrec_ref, musig_ref,
):
    hidden_dim = w_in_ref.shape[1]
    latent2 = w_musig_ref.shape[1]          # 2 * latent_dim
    latent_dim = latent2 // 2
    input_dim = w_out_ref.shape[1]

    # Packed biases (f32): row 0 = b_in, 1 = b_musig, 2 = b_latent, 3 = b_out.
    b_in = bias_ref[0:1, :hidden_dim]
    b_musig = bias_ref[1:2, :latent2]
    b_lt = bias_ref[2:3, :hidden_dim]
    b_out = bias_ref[3:4, :input_dim]

    # encode: h = relu(x @ W_in + b_in)   (bf16 MXU, f32 accumulate)
    x = x_ref[...].astype(jnp.bfloat16)
    h = jnp.dot(x, w_in_ref[...], preferred_element_type=jnp.float32) + b_in
    h = jnp.maximum(h, 0.0)

    # fused mu/sigma head: one lane-dense [tm, 2*latent] matmul
    musig = (
        jnp.dot(h.astype(jnp.bfloat16), w_musig_ref[...],
                preferred_element_type=jnp.float32)
        + b_musig
    )
    mu = musig[:, :latent_dim]
    sigma = musig[:, latent_dim:]

    # reparametrization trick: z = mu + sigma * eps   (f32)
    z = mu + sigma * eps_ref[...]

    # decode: h2 = relu(z @ W_latent + b_latent)
    h2 = (
        jnp.dot(z.astype(jnp.bfloat16), w_lt_ref[...],
                preferred_element_type=jnp.float32)
        + b_lt
    )
    h2 = jnp.maximum(h2, 0.0)

    # x_reconstructed = sigmoid(h2 @ W_out + b_out)
    logits = (
        jnp.dot(h2.astype(jnp.bfloat16), w_out_ref[...],
                preferred_element_type=jnp.float32)
        + b_out
    )
    xrec_ref[...] = jax.nn.sigmoid(logits).astype(xrec_ref.dtype)
    musig_ref[...] = musig.astype(musig_ref.dtype)


def vae_forward(x, eps, params, *, block_b=None):
    """Fused VAE forward pass.

    x:   [B, input_dim] f32
    eps: [B, latent_dim] f32 (the randn_like noise, supplied externally)
    params: dict with bf16 weights w_in/w_musig/w_lt/w_out ([in, out] layout)
            and f32 packed biases bias_pack [4, padded_width].
    Returns (x_reconstructed, mu, sigma).
    """
    B, input_dim = x.shape
    latent_dim = eps.shape[1]
    hidden_dim = params["w_in"].shape[1]
    latent2 = 2 * latent_dim
    bias_w = params["bias_pack"].shape[1]

    # Batch tile: full batch if small, otherwise 128-row tiles (multiple of 8).
    if block_b is None:
        block_b = B if B <= 128 else 128
    grid = (pl.cdiv(B, block_b),)

    in_specs = [
        pl.BlockSpec((block_b, input_dim), lambda i: (i, 0)),        # x
        pl.BlockSpec((block_b, latent_dim), lambda i: (i, 0)),       # eps
        pl.BlockSpec((input_dim, hidden_dim), lambda i: (0, 0)),     # w_in
        pl.BlockSpec((hidden_dim, latent2), lambda i: (0, 0)),       # w_musig
        pl.BlockSpec((latent_dim, hidden_dim), lambda i: (0, 0)),    # w_latent
        pl.BlockSpec((hidden_dim, input_dim), lambda i: (0, 0)),     # w_out
        pl.BlockSpec((4, bias_w), lambda i: (0, 0)),                 # bias_pack
    ]
    out_shapes = (
        jax.ShapeDtypeStruct((B, input_dim), jnp.float32),   # x_reconstructed
        jax.ShapeDtypeStruct((B, latent2), jnp.float32),     # [mu | sigma]
    )
    out_specs = (
        pl.BlockSpec((block_b, input_dim), lambda i: (i, 0)),
        pl.BlockSpec((block_b, latent2), lambda i: (i, 0)),
    )

    xrec, musig = pl.pallas_call(
        vae_forward_kernel,
        out_shape=out_shapes,
        grid=grid,
        in_specs=in_specs,
        out_specs=out_specs,
        compiler_params=pltpu.CompilerParams(
            dimension_semantics=("parallel",),
        ),
    )(
        x, eps,
        params["w_in"], params["w_musig"], params["w_lt"], params["w_out"],
        params["bias_pack"],
    )

    mu = musig[:, :latent_dim]
    sigma = musig[:, latent_dim:]
    return xrec, mu, sigma


def init_params(key, input_dim, hidden_dim, latent_dim):
    """Synthetic params matching the PyTorch module (weights stored bf16)."""
    ks = jax.random.split(key, 10)

    def linear(kw, kb, fan_in, fan_out):
        # PyTorch default Linear init: U(-1/sqrt(fan_in), 1/sqrt(fan_in))
        bound = 1.0 / jnp.sqrt(fan_in)
        w = jax.random.uniform(kw, (fan_in, fan_out), jnp.float32, -bound, bound)
        b = jax.random.uniform(kb, (fan_out,), jnp.float32, -bound, bound)
        return w, b

    w_in, b_in = linear(ks[0], ks[1], input_dim, hidden_dim)
    w_mu, b_mu = linear(ks[2], ks[3], hidden_dim, latent_dim)
    w_sg, b_sg = linear(ks[4], ks[5], hidden_dim, latent_dim)
    w_lt, b_lt = linear(ks[6], ks[7], latent_dim, hidden_dim)
    w_ot, b_ot = linear(ks[8], ks[9], hidden_dim, input_dim)

    # Fuse mu/sigma heads: [hidden, 2*latent] weight, [2*latent] bias.
    w_musig = jnp.concatenate([w_mu, w_sg], axis=1)
    b_musig = jnp.concatenate([b_mu, b_sg], axis=0)

    # Pack all biases into one [4, padded_width] f32 array (lane-dense width).
    widths = (hidden_dim, 2 * latent_dim, hidden_dim, input_dim)
    bw = max(widths)
    bw = ((bw + 127) // 128) * 128

    def pad_row(b):
        return jnp.pad(b, (0, bw - b.shape[0]))[None, :]

    bias_pack = jnp.concatenate(
        [pad_row(b_in), pad_row(b_musig), pad_row(b_lt), pad_row(b_ot)], axis=0
    )

    return {
        "w_in": w_in.astype(jnp.bfloat16),
        "w_musig": w_musig.astype(jnp.bfloat16),
        "w_lt": w_lt.astype(jnp.bfloat16),
        "w_out": w_ot.astype(jnp.bfloat16),
        "bias_pack": bias_pack,  # f32
    }


def vae_forward_ref(x, eps, p):
    """Pure-JAX reference mirroring the kernel's bf16-weight / f32-acc math."""
    hidden_dim = p["w_in"].shape[1]
    latent2 = p["w_musig"].shape[1]
    latent_dim = latent2 // 2
    input_dim = p["w_out"].shape[1]
    bias = p["bias_pack"]
    b_in = bias[0:1, :hidden_dim]
    b_musig = bias[1:2, :latent2]
    b_lt = bias[2:3, :hidden_dim]
    b_out = bias[3:4, :input_dim]

    def mm(a, w):
        return jnp.dot(a.astype(jnp.bfloat16), w,
                       preferred_element_type=jnp.float32)

    h = jnp.maximum(mm(x, p["w_in"]) + b_in, 0.0)
    musig = mm(h, p["w_musig"]) + b_musig
    mu = musig[:, :latent_dim]
    sigma = musig[:, latent_dim:]
    z = mu + sigma * eps
    h2 = jnp.maximum(mm(z, p["w_lt"]) + b_lt, 0.0)
    xrec = jax.nn.sigmoid(mm(h2, p["w_out"]) + b_out)
    return xrec, mu, sigma


if __name__ == "__main__":
    # Small shapes consistent with the module: flattened "image" input.
    B, INPUT_DIM, HIDDEN_DIM, LATENT_DIM = 8, 256, 128, 64

    key = jax.random.PRNGKey(0)
    k_x, k_eps, k_params = jax.random.split(key, 3)

    x = jax.random.uniform(k_x, (B, INPUT_DIM), jnp.float32)
    # torch.randn_like(sigma) equivalent, supplied deterministically from outside.
    eps = jax.random.normal(k_eps, (B, LATENT_DIM), jnp.float32)
    params = init_params(k_params, INPUT_DIM, HIDDEN_DIM, LATENT_DIM)

    x_rec, mu, sigma = vae_forward(x, eps, params)
    jax.block_until_ready((x_rec, mu, sigma))

    # Correctness check against a pure-JAX reference using the same bf16 weights.
    x_rec_r, mu_r, sigma_r = vae_forward_ref(x, eps, params)
    assert jnp.allclose(x_rec, x_rec_r, atol=2e-3, rtol=2e-3)
    assert jnp.allclose(mu, mu_r, atol=2e-3, rtol=2e-3)
    assert jnp.allclose(sigma, sigma_r, atol=2e-3, rtol=2e-3)

    print("KERNEL_OK")
</pallas_src>

<mosaic_0001>
module attributes {stable_mosaic.version = 11 : i64} {
  func.func @vae_forward_kernel(%arg0: i32, %arg1: memref<8x256xf32, #tpu.memory_space<vmem>>, %arg2: memref<8x64xf32, #tpu.memory_space<vmem>>, %arg3: memref<256x128xbf16, #tpu.memory_space<vmem>>, %arg4: memref<128x128xbf16, #tpu.memory_space<vmem>>, %arg5: memref<64x128xbf16, #tpu.memory_space<vmem>>, %arg6: memref<128x256xbf16, #tpu.memory_space<vmem>>, %arg7: memref<4x256xf32, #tpu.memory_space<vmem>>, %arg8: memref<8x256xf32, #tpu.memory_space<vmem>>, %arg9: memref<8x128xf32, #tpu.memory_space<vmem>>) attributes {dimension_semantics = [#tpu.dimension_semantics<parallel>], iteration_bounds = array<i64: 1>, scalar_prefetch = 0 : i64, scratch_operands = 0 : i64, tpu.core_type = #tpu.core_type<tc>, window_params = [{transform_indices = @transform_0, window_bounds = array<i64: 8, 256>}, {transform_indices = @transform_1, window_bounds = array<i64: 8, 64>}, {pipeline_mode = #tpu.pipeline_mode<synchronous>, transform_indices = @transform_2, window_bounds = array<i64: 256, 128>}, {pipeline_mode = #tpu.pipeline_mode<synchronous>, transform_indices = @transform_3, window_bounds = array<i64: 128, 128>}, {pipeline_mode = #tpu.pipeline_mode<synchronous>, transform_indices = @transform_4, window_bounds = array<i64: 64, 128>}, {pipeline_mode = #tpu.pipeline_mode<synchronous>, transform_indices = @transform_5, window_bounds = array<i64: 128, 256>}, {pipeline_mode = #tpu.pipeline_mode<synchronous>, transform_indices = @transform_6, window_bounds = array<i64: 4, 256>}, {transform_indices = @transform_7, window_bounds = array<i64: 8, 256>}, {transform_indices = @transform_8, window_bounds = array<i64: 8, 128>}]} {
    %c0 = arith.constant 0 : index
    %c0_0 = arith.constant 0 : index
    %0 = vector.load %arg7[%c0, %c0_0] : memref<4x256xf32, #tpu.memory_space<vmem>>, vector<1x128xf32>
    %c1 = arith.constant 1 : index
    %c0_1 = arith.constant 0 : index
    %1 = vector.load %arg7[%c1, %c0_1] : memref<4x256xf32, #tpu.memory_space<vmem>>, vector<1x128xf32>
    %c2 = arith.constant 2 : index
    %c0_2 = arith.constant 0 : index
    %2 = vector.load %arg7[%c2, %c0_2] : memref<4x256xf32, #tpu.memory_space<vmem>>, vector<1x128xf32>
    %c3 = arith.constant 3 : index
    %c0_3 = arith.constant 0 : index
    %3 = vector.load %arg7[%c3, %c0_3] : memref<4x256xf32, #tpu.memory_space<vmem>>, vector<1x256xf32>
    %c0_4 = arith.constant 0 : index
    %c0_5 = arith.constant 0 : index
    %4 = vector.load %arg1[%c0_4, %c0_5] : memref<8x256xf32, #tpu.memory_space<vmem>>, vector<8x256xf32>
    %5 = arith.truncf %4 : vector<8x256xf32> to vector<8x256xbf16>
    %c0_6 = arith.constant 0 : index
    %c0_7 = arith.constant 0 : index
    %6 = vector.load %arg3[%c0_6, %c0_7] : memref<256x128xbf16, #tpu.memory_space<vmem>>, vector<256x128xbf16>
    %cst = arith.constant dense<0.000000e+00> : vector<8x128xf32>
    %7 = tpu.matmul %5, %6, %cst {dimension_numbers = #tpu.dot_dimension_numbers<[1], [0], [0], [1], [0, 0, 1, 1], [], []>} : vector<8x256xbf16>, vector<256x128xbf16>, vector<8x128xf32> -> vector<8x128xf32>
    %8 = vector.broadcast %0 : vector<1x128xf32> to vector<8x128xf32>
    %9 = arith.addf %7, %8 : vector<8x128xf32>
    %cst_8 = arith.constant 0.000000e+00 : f32
    %10 = vector.broadcast %cst_8 : f32 to vector<8x128xf32>
    %11 = arith.maximumf %9, %10 : vector<8x128xf32>
    %12 = arith.truncf %11 : vector<8x128xf32> to vector<8x128xbf16>
    %c0_9 = arith.constant 0 : index
    %c0_10 = arith.constant 0 : index
    %13 = vector.load %arg4[%c0_9, %c0_10] : memref<128x128xbf16, #tpu.memory_space<vmem>>, vector<128x128xbf16>
    %cst_11 = arith.constant dense<0.000000e+00> : vector<8x128xf32>
    %14 = tpu.matmul %12, %13, %cst_11 {dimension_numbers = #tpu.dot_dimension_numbers<[1], [0], [0], [1], [0, 0, 1, 1], [], []>} : vector<8x128xbf16>, vector<128x128xbf16>, vector<8x128xf32> -> vector<8x128xf32>
    %15 = vector.broadcast %1 : vector<1x128xf32> to vector<8x128xf32>
    %16 = arith.addf %14, %15 : vector<8x128xf32>
    %17 = vector.extract_strided_slice %16 {offsets = [0, 0], sizes = [8, 64], strides = [1, 1]} : vector<8x128xf32> to vector<8x64xf32>
    %18 = vector.extract_strided_slice %16 {offsets = [0, 64], sizes = [8, 64], strides = [1, 1]} : vector<8x128xf32> to vector<8x64xf32>
    %c0_12 = arith.constant 0 : index
    %c0_13 = arith.constant 0 : index
    %19 = vector.load %arg2[%c0_12, %c0_13] : memref<8x64xf32, #tpu.memory_space<vmem>>, vector<8x64xf32>
    %20 = arith.mulf %18, %19 : vector<8x64xf32>
    %21 = arith.addf %17, %20 : vector<8x64xf32>
    %22 = arith.truncf %21 : vector<8x64xf32> to vector<8x64xbf16>
    %c0_14 = arith.constant 0 : index
    %c0_15 = arith.constant 0 : index
    %23 = vector.load %arg5[%c0_14, %c0_15] : memref<64x128xbf16, #tpu.memory_space<vmem>>, vector<64x128xbf16>
    %cst_16 = arith.constant dense<0.000000e+00> : vector<8x128xf32>
    %24 = tpu.matmul %22, %23, %cst_16 {dimension_numbers = #tpu.dot_dimension_numbers<[1], [0], [0], [1], [0, 0, 1, 1], [], []>} : vector<8x64xbf16>, vector<64x128xbf16>, vector<8x128xf32> -> vector<8x128xf32>
    %25 = vector.broadcast %2 : vector<1x128xf32> to vector<8x128xf32>
    %26 = arith.addf %24, %25 : vector<8x128xf32>
    %cst_17 = arith.constant 0.000000e+00 : f32
    %27 = vector.broadcast %cst_17 : f32 to vector<8x128xf32>
    %28 = arith.maximumf %26, %27 : vector<8x128xf32>
    %29 = arith.truncf %28 : vector<8x128xf32> to vector<8x128xbf16>
    %c0_18 = arith.constant 0 : index
    %c0_19 = arith.constant 0 : index
    %30 = vector.load %arg6[%c0_18, %c0_19] : memref<128x256xbf16, #tpu.memory_space<vmem>>, vector<128x256xbf16>
    %cst_20 = arith.constant dense<0.000000e+00> : vector<8x256xf32>
    %31 = tpu.matmul %29, %30, %cst_20 {dimension_numbers = #tpu.dot_dimension_numbers<[1], [0], [0], [1], [0, 0, 1, 1], [], []>} : vector<8x128xbf16>, vector<128x256xbf16>, vector<8x256xf32> -> vector<8x256xf32>
    %32 = vector.broadcast %3 : vector<1x256xf32> to vector<8x256xf32>
    %33 = arith.addf %31, %32 : vector<8x256xf32>
    %34 = arith.negf %33 : vector<8x256xf32>
    %35 = math.exp %34 : vector<8x256xf32>
    %cst_21 = arith.constant 1.000000e+00 : f32
    %36 = vector.broadcast %cst_21 : f32 to vector<8x256xf32>
    %37 = arith.addf %36, %35 : vector<8x256xf32>
    %38 = arith.divf %36, %37 : vector<8x256xf32>
    %c0_22 = arith.constant 0 : index
    %c0_23 = arith.constant 0 : index
    %39 = vector.load %arg8[%c0_22, %c0_23] : memref<8x256xf32, #tpu.memory_space<vmem>>, vector<8x256xf32>
    tpu.vector_store %arg8[%c0_22, %c0_23], %38 {strides = array<i32>} : memref<8x256xf32, #tpu.memory_space<vmem>>, vector<8x256xf32>,
    %c0_24 = arith.constant 0 : index
    %c0_25 = arith.constant 0 : index
    %40 = vector.load %arg9[%c0_24, %c0_25] : memref<8x128xf32, #tpu.memory_space<vmem>>, vector<8x128xf32>
    tpu.vector_store %arg9[%c0_24, %c0_25], %16 {strides = array<i32>} : memref<8x128xf32, #tpu.memory_space<vmem>>, vector<8x128xf32>,
    return
  }
  func.func @transform_0(%arg0: i32) -> (i32, i32) {
    %c0_i32 = arith.constant 0 : i32
    %c0_i32_0 = arith.constant 0 : i32
    return %arg0, %c0_i32 : i32, i32
  }
  func.func @transform_1(%arg0: i32) -> (i32, i32) {
    %c0_i32 = arith.constant 0 : i32
    %c0_i32_0 = arith.constant 0 : i32
    return %arg0, %c0_i32 : i32, i32
  }
  func.func @transform_2(%arg0: i32) -> (i32, i32) {
    %c0_i32 = arith.constant 0 : i32
    %c0_i32_0 = arith.constant 0 : i32
    %c0_i32_1 = arith.constant 0 : i32
    return %c0_i32, %c0_i32_0 : i32, i32
  }
  func.func @transform_3(%arg0: i32) -> (i32, i32) {
    %c0_i32 = arith.constant 0 : i32
    %c0_i32_0 = arith.constant 0 : i32
    %c0_i32_1 = arith.constant 0 : i32
    return %c0_i32, %c0_i32_0 : i32, i32
  }
  func.func @transform_4(%arg0: i32) -> (i32, i32) {
    %c0_i32 = arith.constant 0 : i32
    %c0_i32_0 = arith.constant 0 : i32
    %c0_i32_1 = arith.constant 0 : i32
    return %c0_i32, %c0_i32_0 : i32, i32
  }
  func.func @transform_5(%arg0: i32) -> (i32, i32) {
    %c0_i32 = arith.constant 0 : i32
    %c0_i32_0 = arith.constant 0 : i32
    %c0_i32_1 = arith.constant 0 : i32
    return %c0_i32, %c0_i32_0 : i32, i32
  }
  func.func @transform_6(%arg0: i32) -> (i32, i32) {
    %c0_i32 = arith.constant 0 : i32
    %c0_i32_0 = arith.constant 0 : i32
    %c0_i32_1 = arith.constant 0 : i32
    return %c0_i32, %c0_i32_0 : i32, i32
  }
  func.func @transform_7(%arg0: i32) -> (i32, i32) {
    %c0_i32 = arith.constant 0 : i32
    %c0_i32_0 = arith.constant 0 : i32
    return %arg0, %c0_i32 : i32, i32
  }
  func.func @transform_8(%arg0: i32) -> (i32, i32) {
    %c0_i32 = arith.constant 0 : i32
    %c0_i32_0 = arith.constant 0 : i32
    return %arg0, %c0_i32 : i32, i32
  }
}

</mosaic_0001>

<llo_original>
// kernel: tpu_custom_call.1
$region0: #{tpu_custom_call.1}
  #allocation0 [shape = 'u32[]', space=smem, size = 0x4, offset = 0x4, fixed_abs, tag = 'smem constant byte address 0x4 - core index']
  #allocation1 [shape = 'u32[72,128]{1,0:T(1,128)}', space=vmem, size = 0x9000, scoped, tag = 'internal scratch']
  %s0 = inlined_call_operand.hbm [shape: f32[8,256], index: 0, kind: input, shape index: {}]
  %s1 = inlined_call_operand.hbm [shape: f32[8,64], index: 1, kind: input, shape index: {}]
  %s2 = inlined_call_operand.hbm [shape: bf16[256,128], index: 2, kind: input, shape index: {}]
  %s3 = inlined_call_operand.hbm [shape: bf16[128,128], index: 3, kind: input, shape index: {}]
  %s4 = inlined_call_operand.hbm [shape: bf16[64,128], index: 4, kind: input, shape index: {}]
  %s5 = inlined_call_operand.hbm [shape: bf16[128,256], index: 5, kind: input, shape index: {}]
  %s6 = inlined_call_operand.hbm [shape: f32[4,256], index: 6, kind: input, shape index: {}]
  %s7 = inlined_call_operand.hbm [shape: f32[8,256], index: 7, kind: output, shape index: {0}]
  %s8 = inlined_call_operand.hbm [shape: f32[8,128], index: 8, kind: output, shape index: {1}]
  %9 = xla_tuple %s7, %s8
  %s10 = sld [smem:[#allocation0]]
  $region74: #{tpu_custom_call.1} parent=0
    _
  %s12 = ssub.s32 1, %s10
  %s13 = scalar_select 0, %s12, %s10
  $region1: #{tpu_custom_call.1} parent=0
    #allocation2 [shape = 'u8[8192]{0}', space=vmem, size = 0x2000, scoped, tag = 'input window, operand 0, single buffered']
    #allocation3 [shape = 's32[1]{0}', space=sflag, size = 0x4, scoped, tag = 'scoped memory for tpu_custom_call.1']
    #allocation4 [shape = 's32[1]{0}', space=sflag, size = 0x4, scoped, tag = 'scoped memory for tpu_custom_call.1']
    #allocation5 [shape = 'u8[4096]{0}', space=vmem, size = 0x1000, scoped, tag = 'input window, operand 1, single buffered']
    #allocation6 [shape = 's32[1]{0}', space=sflag, size = 0x4, scoped, tag = 'scoped memory for tpu_custom_call.1']
    #allocation7 [shape = 'u8[65536]{0}', space=vmem, size = 0x10000, scoped, tag = 'input window, operand 2, single buffered']
    #allocation8 [shape = 'u8[32768]{0}', space=vmem, size = 0x8000, scoped, tag = 'input window, operand 3, single buffered']
    #allocation9 [shape = 's32[1]{0}', space=sflag, size = 0x4, scoped, tag = 'scoped memory for tpu_custom_call.1']
    #allocation10 [shape = 'u8[16384]{0}', space=vmem, size = 0x4000, scoped, tag = 'input window, operand 4, single buffered']
    #allocation11 [shape = 'u8[65536]{0}', space=vmem, size = 0x10000, scoped, tag = 'input window, operand 5, single buffered']
    #allocation12 [shape = 's32[1]{0}', space=sflag, size = 0x4, scoped, tag = 'scoped memory for tpu_custom_call.1']
    #allocation13 [shape = 'u8[4096]{0}', space=vmem, size = 0x1000, scoped, tag = 'input window, operand 6, single buffered']
    #allocation14 [shape = 'u8[8192]{0}', space=vmem, size = 0x2000, scoped, tag = 'output window, operand 0, single buffered']
    #allocation15 [shape = 'u8[4096]{0}', space=vmem, size = 0x1000, scoped, tag = 'output window, operand 1, single buffered']
    #allocation16 [shape = 's32[1]{0}', space=sflag, size = 0x4, scoped, tag = 'scoped memory for tpu_custom_call.1']
    %14 = vsyncpa [#allocation3], 0
    %15 = vsyncpa [#allocation6], 0
    %16 = vsyncpa [#allocation9], 0
    %17 = vsyncpa [#allocation12], 0
    %18 = vsyncpa [#allocation4], 0
    %19 = vsyncpa [#allocation16], 0
    // Predicated region
    $region2: #{tpu_custom_call.1} parent=1 // pred_check
      _
    $region3: #{tpu_custom_call.1} parent=1 // pred_check_branch
      %21 = sbr.rel (0) target = $region5
    $region4: #{tpu_custom_call.1} parent=1 // pred_region
      %23 = vsyncadd [#allocation3], 0
      %s25 = sshll.u32 %s0, 4
      %s26 = int_to_ptr.hbm [resolvable:$true] %s25
      %s27 = sshll.u32 [#allocation2], 4
      %s28 = int_to_ptr.vmem [resolvable:$true] %s27
      %30 = dma.hbm_to_vmem [thread:$0]  %s26, 256, %s28, [#allocation3]
    $region5: #{tpu_custom_call.1} parent=1 // pred_fallthru
      _
    // Predicated region
    $region6: #{tpu_custom_call.1} parent=1 // pred_check
      _
    $region7: #{tpu_custom_call.1} parent=1 // pred_check_branch
      %32 = sbr.rel (0) target = $region9
    $region8: #{tpu_custom_call.1} parent=1 // pred_region
      %34 = vsyncadd [#allocation6], 0
      %s36 = sshll.u32 %s1, 4
      %s37 = int_to_ptr.hbm [resolvable:$true] %s36
      %s38 = sshll.u32 [#allocation5], 4
      %s39 = int_to_ptr.vmem [resolvable:$true] %s38
      %41 = dma.hbm_to_vmem [thread:$0]  %s37, 128, %s39, [#allocation6]
    $region9: #{tpu_custom_call.1} parent=1 // pred_fallthru
      _
    // Predicated region
    $region10: #{tpu_custom_call.1} parent=1 // pred_check
      _
    $region11: #{tpu_custom_call.1} parent=1 // pred_check_branch
      %43 = sbr.rel (0) target = $region13
    $region12: #{tpu_custom_call.1} parent=1 // pred_region
      %45 = vsyncadd [#allocation6], 0
      %s46 = sshll.u32 %s2, 4
      %s47 = int_to_ptr.hbm [resolvable:$true] %s46
      %s48 = sshll.u32 [#allocation7], 4
      %s49 = int_to_ptr.vmem [resolvable:$true] %s48
      %54 = dma.hbm_to_vmem [thread:$0]  %s47, 2048, %s49, [#allocation6], 64, 64, 4
    $region13: #{tpu_custom_call.1} parent=1 // pred_fallthru
      _
    // Predicated region
    $region14: #{tpu_custom_call.1} parent=1 // pred_check
      _
    $region15: #{tpu_custom_call.1} parent=1 // pred_check_branch
      %56 = sbr.rel (0) target = $region17
    $region16: #{tpu_custom_call.1} parent=1 // pred_region
      %58 = vsyncadd [#allocation9], 0
      %s59 = sshll.u32 %s3, 4
      %s60 = int_to_ptr.hbm [resolvable:$true] %s59
      %s61 = sshll.u32 [#allocation8], 4
      %s62 = int_to_ptr.vmem [resolvable:$true] %s61
      %67 = dma.hbm_to_vmem [thread:$0]  %s60, 1024, %s62, [#allocation9], 64, 64, 4
    $region17: #{tpu_custom_call.1} parent=1 // pred_fallthru
      _
    // Predicated region
    $region18: #{tpu_custom_call.1} parent=1 // pred_check
      _
    $region19: #{tpu_custom_call.1} parent=1 // pred_check_branch
      %69 = sbr.rel (0) target = $region21
    $region20: #{tpu_custom_call.1} parent=1 // pred_region
      %71 = vsyncadd [#allocation9], 0
      %s72 = sshll.u32 %s4, 4
      %s73 = int_to_ptr.hbm [resolvable:$true] %s72
      %s74 = sshll.u32 [#allocation10], 4
      %s75 = int_to_ptr.vmem [resolvable:$true] %s74
      %80 = dma.hbm_to_vmem [thread:$0]  %s73, 512, %s75, [#allocation9], 64, 64, 4
    $region21: #{tpu_custom_call.1} parent=1 // pred_fallthru
      _
    // Predicated region
    $region22: #{tpu_custom_call.1} parent=1 // pred_check
      _
    $region23: #{tpu_custom_call.1} parent=1 // pred_check_branch
      %82 = sbr.rel (0) target = $region25
    $region24: #{tpu_custom_call.1} parent=1 // pred_region
      %84 = vsyncadd [#allocation12], 0
      %s85 = sshll.u32 %s5, 4
      %s86 = int_to_ptr.hbm [resolvable:$true] %s85
      %s87 = sshll.u32 [#allocation11], 4
      %s88 = int_to_ptr.vmem [resolvable:$true] %s87
      %93 = dma.hbm_to_vmem [thread:$0]  %s86, 2048, %s88, [#allocation12], 128, 128, 8
    $region25: #{tpu_custom_call.1} parent=1 // pred_fallthru
      _
    // Predicated region
    $region26: #{tpu_custom_call.1} parent=1 // pred_check
      _
    $region27: #{tpu_custom_call.1} parent=1 // pred_check_branch
      %95 = sbr.rel (0) target = $region29
    $region28: #{tpu_custom_call.1} parent=1 // pred_region
      %97 = vsyncadd [#allocation12], 0
      %s99 = sshll.u32 %s6, 4
      %s100 = int_to_ptr.hbm [resolvable:$true] %s99
      %s101 = sshll.u32 [#allocation13], 4
      %s102 = int_to_ptr.vmem [resolvable:$true] %s101
      %104 = dma.hbm_to_vmem [thread:$0]  %s100, 128, %s102, [#allocation12]
    $region29: #{tpu_custom_call.1} parent=1 // pred_fallthru
      _
    // Predicated region
    $region30: #{tpu_custom_call.1} parent=1 // pred_check
      _
    $region31: #{tpu_custom_call.1} parent=1 // pred_check_branch
      %106 = sbr.rel (0) target = $region33
    $region32: #{tpu_custom_call.1} parent=1 // pred_region
      %108 = dma.done [#allocation3], 256
    $region33: #{tpu_custom_call.1} parent=1 // pred_fallthru
      _
    // Predicated region
    $region34: #{tpu_custom_call.1} parent=1 // pred_check
      _
    $region35: #{tpu_custom_call.1} parent=1 // pred_check_branch
      %110 = sbr.rel (0) target = $region37
    $region36: #{tpu_custom_call.1} parent=1 // pred_region
      %112 = dma.done [#allocation6], 128
    $region37: #{tpu_custom_call.1} parent=1 // pred_fallthru
      _
    // Predicated region
    $region38: #{tpu_custom_call.1} parent=1 // pred_check
      _
    $region39: #{tpu_custom_call.1} parent=1 // pred_check_branch
      %114 = sbr.rel (0) target = $region41
    $region40: #{tpu_custom_call.1} parent=1 // pred_region
      %116 = dma.done [#allocation6], 2048
    $region41: #{tpu_custom_call.1} parent=1 // pred_fallthru
      _
    // Predicated region
    $region42: #{tpu_custom_call.1} parent=1 // pred_check
      _
    $region43: #{tpu_custom_call.1} parent=1 // pred_check_branch
      %118 = sbr.rel (0) target = $region45
    $region44: #{tpu_custom_call.1} parent=1 // pred_region
      %120 = dma.done [#allocation9], 1024
    $region45: #{tpu_custom_call.1} parent=1 // pred_fallthru
      _
    // Predicated region
    $region46: #{tpu_custom_call.1} parent=1 // pred_check
      _
    $region47: #{tpu_custom_call.1} parent=1 // pred_check_branch
      %122 = sbr.rel (0) target = $region49
    $region48: #{tpu_custom_call.1} parent=1 // pred_region
      %124 = dma.done [#allocation9], 512
    $region49: #{tpu_custom_call.1} parent=1 // pred_fallthru
      _
    // Predicated region
    $region50: #{tpu_custom_call.1} parent=1 // pred_check
      _
    $region51: #{tpu_custom_call.1} parent=1 // pred_check_branch
      %126 = sbr.rel (0) target = $region53
    $region52: #{tpu_custom_call.1} parent=1 // pred_region
      %128 = dma.done [#allocation12], 2048
    $region53: #{tpu_custom_call.1} parent=1 // pred_fallthru
      _
    // Predicated region
    $region54: #{tpu_custom_call.1} parent=1 // pred_check
      _
    $region55: #{tpu_custom_call.1} parent=1 // pred_check_branch
      %130 = sbr.rel (0) target = $region57
    $region56: #{tpu_custom_call.1} parent=1 // pred_region
      %132 = dma.done [#allocation12], 128
    $region57: #{tpu_custom_call.1} parent=1 // pred_fallthru
      _
    %v134 = vld [vmem:[#allocation13] sm:$0x1]
    %v135 = vld [vmem:[#allocation13 + $0x1] sm:$0x1]
    %v136 = vld [vmem:[#allocation13 + $0x2] sm:$0x1]
    %s137 = scalar_lea.vmem [#allocation13], 3
    %v138 = vld [vmem:[%s137] ss:$4 sm:$0x3]
    %v139 = vld [vmem:[#allocation2] sm:$0xff]
    %v140 = vld [vmem:[#allocation2 + $0x8] sm:$0xff]
    %v141 = vpack.c.bf16 %v139, %v139
    %v142 = vpack.c.bf16 %v140, %v140
    %v143 = vld [vmem:[#allocation7] sm:$0xf]
    %v144 = vld [vmem:[#allocation7 + $0x4] sm:$0xf]
    %v145 = vld [vmem:[#allocation7 + $0x8] sm:$0xf]
    %v146 = vld [vmem:[#allocation7 + $0xc] sm:$0xf]
    %v147 = vld [vmem:[#allocation7 + $0x10] sm:$0xf]
    %v148 = vld [vmem:[#allocation7 + $0x14] sm:$0xf]
    %v149 = vld [vmem:[#allocation7 + $0x18] sm:$0xf]
    %v150 = vld [vmem:[#allocation7 + $0x1c] sm:$0xf]
    %v151 = vld [vmem:[#allocation7 + $0x20] sm:$0xf]
    %v152 = vld [vmem:[#allocation7 + $0x24] sm:$0xf]
    %v153 = vld [vmem:[#allocation7 + $0x28] sm:$0xf]
    %v154 = vld [vmem:[#allocation7 + $0x2c] sm:$0xf]
    %v155 = vld [vmem:[#allocation7 + $0x30] sm:$0xf]
    %v156 = vld [vmem:[#allocation7 + $0x34] sm:$0xf]
    %v157 = vld [vmem:[#allocation7 + $0x38] sm:$0xf]
    %v158 = vld [vmem:[#allocation7 + $0x3c] sm:$0xf]
    %v159 = vld [vmem:[#allocation7 + $0x40] sm:$0xf]
    %v160 = vld [vmem:[#allocation7 + $0x44] sm:$0xf]
    %v161 = vld [vmem:[#allocation7 + $0x48] sm:$0xf]
    %v162 = vld [vmem:[#allocation7 + $0x4c] sm:$0xf]
    %v163 = vld [vmem:[#allocation7 + $0x50] sm:$0xf]
    %v164 = vld [vmem:[#allocation7 + $0x54] sm:$0xf]
    %v165 = vld [vmem:[#allocation7 + $0x58] sm:$0xf]
    %v166 = vld [vmem:[#allocation7 + $0x5c] sm:$0xf]
    %v167 = vld [vmem:[#allocation7 + $0x60] sm:$0xf]
    %v168 = vld [vmem:[#allocation7 + $0x64] sm:$0xf]
    %v169 = vld [vmem:[#allocation7 + $0x68] sm:$0xf]
    %v170 = vld [vmem:[#allocation7 + $0x6c] sm:$0xf]
    %v171 = vld [vmem:[#allocation7 + $0x70] sm:$0xf]
    %v172 = vld [vmem:[#allocation7 + $0x74] sm:$0xf]
    %v173 = vld [vmem:[#allocation7 + $0x78] sm:$0xf]
    %v174 = vld [vmem:[#allocation7 + $0x7c] sm:$0xf]
    %v175 = vperm.slane %v134, 0
    %v208 = vunpack.c.l.b16 %v143
    %v209 = vunpack.c.l.b16 %v144
    %v210 = vunpack.c.l.b16 %v145
    %v211 = vunpack.c.l.b16 %v146
    %v212 = vunpack.c.l.b16 %v147
    %v213 = vunpack.c.l.b16 %v148
    %v214 = vunpack.c.l.b16 %v149
    %v215 = vunpack.c.l.b16 %v150
    %v216 = vunpack.c.l.b16 %v151
    %v217 = vunpack.c.l.b16 %v152
    %v218 = vunpack.c.l.b16 %v153
    %v219 = vunpack.c.l.b16 %v154
    %v220 = vunpack.c.l.b16 %v155
    %v221 = vunpack.c.l.b16 %v156
    %v222 = vunpack.c.l.b16 %v157
    %v223 = vunpack.c.l.b16 %v158
    %v224 = vunpack.c.l.b16 %v159
    %v225 = vunpack.c.l.b16 %v160
    %v226 = vunpack.c.l.b16 %v161
    %v227 = vunpack.c.l.b16 %v162
    %v228 = vunpack.c.l.b16 %v163
    %v229 = vunpack.c.l.b16 %v164
    %v230 = vunpack.c.l.b16 %v165
    %v231 = vunpack.c.l.b16 %v166
    %v232 = vunpack.c.l.b16 %v167
    %v233 = vunpack.c.l.b16 %v168
    %v234 = vunpack.c.l.b16 %v169
    %v235 = vunpack.c.l.b16 %v170
    %v236 = vunpack.c.l.b16 %v171
    %v237 = vunpack.c.l.b16 %v172
    %v238 = vunpack.c.l.b16 %v173
    %v239 = vunpack.c.l.b16 %v174
    %v240 = vpack.c.b16 %v209, %v208
    %v241 = vpack.c.b16 %v211, %v210
    %v242 = vpack.c.b16 %v213, %v212
    %v243 = vpack.c.b16 %v215, %v214
    %v244 = vpack.c.b16 %v217, %v216
    %v245 = vpack.c.b16 %v219, %v218
    %v246 = vpack.c.b16 %v221, %v220
    %v247 = vpack.c.b16 %v223, %v222
    %v248 = vpack.c.b16 %v225, %v224
    %v249 = vpack.c.b16 %v227, %v226
    %v250 = vpack.c.b16 %v229, %v228
    %v251 = vpack.c.b16 %v231, %v230
    %v252 = vpack.c.b16 %v233, %v232
    %v253 = vpack.c.b16 %v235, %v234
    %v254 = vpack.c.b16 %v237, %v236
    %v255 = vpack.c.b16 %v239, %v238
    %272 = vmatpush.bf16.msra.mxu0 %v247
    %273 = vmatpush.bf16.msra.mxu0 %v246
    %274 = vmatpush.bf16.msra.mxu0 %v245
    %275 = vmatpush.bf16.msra.mxu0 %v244
    %276 = vmatpush.bf16.msra.mxu0 %v243
    %277 = vmatpush.bf16.msra.mxu0 %v242
    %278 = vmatpush.bf16.msra.mxu0 %v241
    %279 = vmatpush.bf16.msra.mxu0 %v240
    %280 = vmatmul.bf16.gmra.mxu0 %v141
    %v281 = vpop.f32.mrf.mxu0
    %v282 = vadd.f32 %v175, %v281
    %v283 = vpop.f32.mrf.mxu0
    %284 = vdwg.mxu0
    %285 = vmatpush.bf16.msra.mxu0 %v255
    %286 = vmatpush.bf16.msra.mxu0 %v254
    %287 = vmatpush.bf16.msra.mxu0 %v253
    %288 = vmatpush.bf16.msra.mxu0 %v252
    %289 = vmatpush.bf16.msra.mxu0 %v251
    %290 = vmatpush.bf16.msra.mxu0 %v250
    %291 = vmatpush.bf16.msra.mxu0 %v249
    %292 = vmatpush.bf16.msra.mxu0 %v248
    %293 = vmatmul.bf16.gmra.mxu0 %v142
    %v294 = vpop.f32.mrf.mxu0
    %v295 = vadd.f32 %v282, %v294
    %v296 = vpop.f32.mrf.mxu0
    %297 = vdwg.mxu0
    %v298 = vmax.f32 %v295, 0.0
    %v299 = vpack.c.bf16 %v298, %v298
    %v300 = vld [vmem:[#allocation8] sm:$0xf]
    %v301 = vld [vmem:[#allocation8 + $0x4] sm:$0xf]
    %v302 = vld [vmem:[#allocation8 + $0x8] sm:$0xf]
    %v303 = vld [vmem:[#allocation8 + $0xc] sm:$0xf]
    %v304 = vld [vmem:[#allocation8 + $0x10] sm:$0xf]
    %v305 = vld [vmem:[#allocation8 + $0x14] sm:$0xf]
    %v306 = vld [vmem:[#allocation8 + $0x18] sm:$0xf]
    %v307 = vld [vmem:[#allocation8 + $0x1c] sm:$0xf]
    %v308 = vld [vmem:[#allocation8 + $0x20] sm:$0xf]
    %v309 = vld [vmem:[#allocation8 + $0x24] sm:$0xf]
    %v310 = vld [vmem:[#allocation8 + $0x28] sm:$0xf]
    %v311 = vld [vmem:[#allocation8 + $0x2c] sm:$0xf]
    %v312 = vld [vmem:[#allocation8 + $0x30] sm:$0xf]
    %v313 = vld [vmem:[#allocation8 + $0x34] sm:$0xf]
    %v314 = vld [vmem:[#allocation8 + $0x38] sm:$0xf]
    %v315 = vld [vmem:[#allocation8 + $0x3c] sm:$0xf]
    %v316 = vperm.slane %v135, 0
    %v333 = vunpack.c.l.b16 %v300
    %v334 = vunpack.c.l.b16 %v301
    %v335 = vunpack.c.l.b16 %v302
    %v336 = vunpack.c.l.b16 %v303
    %v337 = vunpack.c.l.b16 %v304
    %v338 = vunpack.c.l.b16 %v305
    %v339 = vunpack.c.l.b16 %v306
    %v340 = vunpack.c.l.b16 %v307
    %v341 = vunpack.c.l.b16 %v308
    %v342 = vunpack.c.l.b16 %v309
    %v343 = vunpack.c.l.b16 %v310
    %v344 = vunpack.c.l.b16 %v311
    %v345 = vunpack.c.l.b16 %v312
    %v346 = vunpack.c.l.b16 %v313
    %v347 = vunpack.c.l.b16 %v314
    %v348 = vunpack.c.l.b16 %v315
    %v349 = vpack.c.b16 %v334, %v333
    %v350 = vpack.c.b16 %v336, %v335
    %v351 = vpack.c.b16 %v338, %v337
    %v352 = vpack.c.b16 %v340, %v339
    %v353 = vpack.c.b16 %v342, %v341
    %v354 = vpack.c.b16 %v344, %v343
    %v355 = vpack.c.b16 %v346, %v345
    %v356 = vpack.c.b16 %v348, %v347
    %365 = vmatpush.bf16.msra.mxu0 %v356
    %366 = vmatpush.bf16.msra.mxu0 %v355
    %367 = vmatpush.bf16.msra.mxu0 %v354
    %368 = vmatpush.bf16.msra.mxu0 %v353
    %369 = vmatpush.bf16.msra.mxu0 %v352
    %370 = vmatpush.bf16.msra.mxu0 %v351
    %371 = vmatpush.bf16.msra.mxu0 %v350
    %372 = vmatpush.bf16.msra.mxu0 %v349
    %373 = vmatmul.bf16.gmra.mxu0 %v299
    %v374 = vpop.f32.mrf.mxu0
    %v375 = vadd.f32 %v316, %v374
    %v376 = vpop.f32.mrf.mxu0
    %377 = vdwg.mxu0
    %v378 = vld [vmem:[#allocation5] sm:$0xff]
    %380 = vrot.lane.b32.xlu0 %v378, 64
    %v381 = vpop.permute.xlu0 %380
    %v383 = vmul.f32 %v375, %v381
    %385 = vrot.lane.b32.xlu0 %v383, 64
    %v386 = vpop.permute.xlu0 %385
    %v388 = vadd.f32 %v375, %v386
    %v389 = vpack.c.bf16 %v388, %v388
    %v390 = vld [vmem:[#allocation10] sm:$0xf]
    %v391 = vld [vmem:[#allocation10 + $0x4] sm:$0xf]
    %v392 = vld [vmem:[#allocation10 + $0x8] sm:$0xf]
    %v393 = vld [vmem:[#allocation10 + $0xc] sm:$0xf]
    %v394 = vld [vmem:[#allocation10 + $0x10] sm:$0xf]
    %v395 = vld [vmem:[#allocation10 + $0x14] sm:$0xf]
    %v396 = vld [vmem:[#allocation10 + $0x18] sm:$0xf]
    %v397 = vld [vmem:[#allocation10 + $0x1c] sm:$0xf]
    %v398 = vperm.slane %v136, 0
    %v407 = vunpack.c.l.b16 %v390
    %v408 = vunpack.c.l.b16 %v391
    %v409 = vunpack.c.l.b16 %v392
    %v410 = vunpack.c.l.b16 %v393
    %v411 = vunpack.c.l.b16 %v394
    %v412 = vunpack.c.l.b16 %v395
    %v413 = vunpack.c.l.b16 %v396
    %v414 = vunpack.c.l.b16 %v397
    %v415 = vpack.c.b16 %v408, %v407
    %v416 = vpack.c.b16 %v410, %v409
    %v417 = vpack.c.b16 %v412, %v411
    %v418 = vpack.c.b16 %v414, %v413
    %vm423 = vcmask 523264
    %v425 = vsel %vm423, %v389, 0
    %427 = vmatpush.bf16.msra.mxu0 0
    %428 = vmatpush.bf16.msra.mxu0 0
    %429 = vmatpush.bf16.msra.mxu0 0
    %430 = vmatpush.bf16.msra.mxu0 0
    %431 = vmatpush.bf16.msra.mxu0 %v418
    %432 = vmatpush.bf16.msra.mxu0 %v417
    %433 = vmatpush.bf16.msra.mxu0 %v416
    %434 = vmatpush.bf16.msra.mxu0 %v415
    %435 = vmatmul.bf16.gmra.mxu0 %v425
    %v436 = vpop.f32.mrf.mxu0
    %v437 = vadd.f32 %v398, %v436
    %v438 = vpop.f32.mrf.mxu0
    %439 = vdwg.mxu0
    %v440 = vmax.f32 %v437, 0.0
    %v441 = vpack.c.bf16 %v440, %v440
    %v442 = vld [vmem:[#allocation11] sm:$0xff]
    %v443 = vld [vmem:[#allocation11 + $0x8] sm:$0xff]
    %v444 = vld [vmem:[#allocation11 + $0x10] sm:$0xff]
    %v445 = vld [vmem:[#allocation11 + $0x18] sm:$0xff]
    %v446 = vld [vmem:[#allocation11 + $0x20] sm:$0xff]
    %v447 = vld [vmem:[#allocation11 + $0x28] sm:$0xff]
    %v448 = vld [vmem:[#allocation11 + $0x30] sm:$0xff]
    %v449 = vld [vmem:[#allocation11 + $0x38] sm:$0xff]
    %v450 = vld [vmem:[#allocation11 + $0x40] sm:$0xff]
    %v451 = vld [vmem:[#allocation11 + $0x48] sm:$0xff]
    %v452 = vld [vmem:[#allocation11 + $0x50] sm:$0xff]
    %v453 = vld [vmem:[#allocation11 + $0x58] sm:$0xff]
    %v454 = vld [vmem:[#allocation11 + $0x60] sm:$0xff]
    %v455 = vld [vmem:[#allocation11 + $0x68] sm:$0xff]
    %v456 = vld [vmem:[#allocation11 + $0x70] sm:$0xff]
    %v457 = vld [vmem:[#allocation11 + $0x78] sm:$0xff]
    %v459 = vperm.slane %v138, 0
    %v460 = vperm.slane %v138, 1
    %v479 = vunpack.c.l.b16 %v442
    %v480 = vunpack.c.h.b16 %v442
    %v481 = vunpack.c.l.b16 %v443
    %v482 = vunpack.c.h.b16 %v443
    %v483 = vunpack.c.l.b16 %v444
    %v484 = vunpack.c.h.b16 %v444
    %v485 = vunpack.c.l.b16 %v445
    %v486 = vunpack.c.h.b16 %v445
    %v487 = vunpack.c.l.b16 %v446
    %v488 = vunpack.c.h.b16 %v446
    %v489 = vunpack.c.l.b16 %v447
    %v490 = vunpack.c.h.b16 %v447
    %v491 = vunpack.c.l.b16 %v448
    %v492 = vunpack.c.h.b16 %v448
    %v493 = vunpack.c.l.b16 %v449
    %v494 = vunpack.c.h.b16 %v449
    %v495 = vunpack.c.l.b16 %v450
    %v496 = vunpack.c.h.b16 %v450
    %v497 = vunpack.c.l.b16 %v451
    %v498 = vunpack.c.h.b16 %v451
    %v499 = vunpack.c.l.b16 %v452
    %v500 = vunpack.c.h.b16 %v452
    %v501 = vunpack.c.l.b16 %v453
    %v502 = vunpack.c.h.b16 %v453
    %v503 = vunpack.c.l.b16 %v454
    %v504 = vunpack.c.h.b16 %v454
    %v505 = vunpack.c.l.b16 %v455
    %v506 = vunpack.c.h.b16 %v455
    %v507 = vunpack.c.l.b16 %v456
    %v508 = vunpack.c.h.b16 %v456
    %v509 = vunpack.c.l.b16 %v457
    %v510 = vunpack.c.h.b16 %v457
    %v511 = vpack.c.b16 %v481, %v479
    %v512 = vpack.c.b16 %v482, %v480
    %v513 = vpack.c.b16 %v485, %v483
    %v514 = vpack.c.b16 %v486, %v484
    %v515 = vpack.c.b16 %v489, %v487
    %v516 = vpack.c.b16 %v490, %v488
    %v517 = vpack.c.b16 %v493, %v491
    %v518 = vpack.c.b16 %v494, %v492
    %v519 = vpack.c.b16 %v497, %v495
    %v520 = vpack.c.b16 %v498, %v496
    %v521 = vpack.c.b16 %v501, %v499
    %v522 = vpack.c.b16 %v502, %v500
    %v523 = vpack.c.b16 %v505, %v503
    %v524 = vpack.c.b16 %v506, %v504
    %v525 = vpack.c.b16 %v509, %v507
    %v526 = vpack.c.b16 %v510, %v508
    %543 = vmatpush.bf16.msra.mxu0 %v525
    %544 = vmatpush.bf16.msra.mxu0 %v523
    %545 = vmatpush.bf16.msra.mxu0 %v521
    %546 = vmatpush.bf16.msra.mxu0 %v519
    %547 = vmatpush.bf16.msra.mxu0 %v517
    %548 = vmatpush.bf16.msra.mxu0 %v515
    %549 = vmatpush.bf16.msra.mxu0 %v513
    %550 = vmatpush.bf16.msra.mxu0 %v511
    %551 = vmatmul.bf16.gmra.mxu0 %v441
    %v552 = vpop.f32.mrf.mxu0
    %v553 = vadd.f32 %v459, %v552
    %v554 = vpop.f32.mrf.mxu0
    %555 = vdwg.mxu0
    %556 = vmatpush.bf16.msra.mxu0 %v526
    %557 = vmatpush.bf16.msra.mxu0 %v524
    %558 = vmatpush.bf16.msra.mxu0 %v522
    %559 = vmatpush.bf16.msra.mxu0 %v520
    %560 = vmatpush.bf16.msra.mxu0 %v518
    %561 = vmatpush.bf16.msra.mxu0 %v516
    %562 = vmatpush.bf16.msra.mxu0 %v514
    %563 = vmatpush.bf16.msra.mxu0 %v512
    %564 = vmatmul.bf16.gmra.mxu0 %v441
    %v565 = vpop.f32.mrf.mxu0
    %v566 = vadd.f32 %v460, %v565
    %v567 = vpop.f32.mrf.mxu0
    %568 = vdwg.mxu0
    %v569 = vxor.u32 %v553, 2147483648
    %v570 = vxor.u32 %v566, 2147483648
    %v571 = vmul.f32 %v569, 1.442695
    %v572 = vpow.pop %v571
    %v573 = vmul.f32 %v570, 1.442695
    %v574 = vpow.pop %v573
    %v575 = vadd.f32 %v572, 1.0
    %v576 = vadd.f32 %v574, 1.0
    %v577 = vrcp.pop %v575
    %v578 = vmul.f32 %v575, %v577
    %v579 = vsub.f32 1.0, %v578
    %v580 = vmul.f32 %v577, %v579
    %v581 = vadd.f32 %v577, %v580
    %vm582 = vweird.f32 %v575
    %vm583 = vweird.f32 %v577
    %vm584 = vmor %vm582, %vm583
    %v585 = vsel %vm584, %v577, %v581
    %v586 = vand.u32 2147483647, %v575
    %vm587 = vcmp.eq.f32.partialorder %v586, 8.507059e+37
    %v588 = vand.u32 %v575, 2147483648
    %v589 = vor.u32 1.1754944e-38, %v588
    %v590 = vsel %vm587, %v589, %v585
    %v591 = vmul.f32 1.0, %v590
    %v592 = vrcp.pop %v576
    %v593 = vmul.f32 %v576, %v592
    %v594 = vsub.f32 1.0, %v593
    %v595 = vmul.f32 %v592, %v594
    %v596 = vadd.f32 %v592, %v595
    %vm597 = vweird.f32 %v576
    %vm598 = vweird.f32 %v592
    %vm599 = vmor %vm597, %vm598
    %v600 = vsel %vm599, %v592, %v596
    %v601 = vand.u32 2147483647, %v576
    %vm602 = vcmp.eq.f32.partialorder %v601, 8.507059e+37
    %v603 = vand.u32 %v576, 2147483648
    %v604 = vor.u32 1.1754944e-38, %v603
    %v605 = vsel %vm602, %v604, %v600
    %v606 = vmul.f32 1.0, %v605
    %607 = vst [vmem:[#allocation14] sm:$0xff] %v591
    %608 = vst [vmem:[#allocation14 + $0x8] sm:$0xff] %v606
    %609 = vst [vmem:[#allocation15] sm:$0xff] %v375
    // Predicated region
    $region58: #{tpu_custom_call.1} parent=1 // pred_check
      _
    $region59: #{tpu_custom_call.1} parent=1 // pred_check_branch
      %611 = sbr.rel (0) target = $region61
    $region60: #{tpu_custom_call.1} parent=1 // pred_region
      %613 = vsyncadd [#allocation4], 0
      %s615 = sshll.u32 [#allocation14], 4
      %s616 = int_to_ptr.vmem [resolvable:$true] %s615
      %s617 = sshll.u32 %s7, 4
      %s618 = int_to_ptr.hbm [resolvable:$true] %s617
      %620 = dma.vmem_to_hbm [thread:$0]  %s616, 256, %s618, [#allocation4]
    $region61: #{tpu_custom_call.1} parent=1 // pred_fallthru
      _
    // Predicated region
    $region62: #{tpu_custom_call.1} parent=1 // pred_check
      _
    $region63: #{tpu_custom_call.1} parent=1 // pred_check_branch
      %622 = sbr.rel (0) target = $region65
    $region64: #{tpu_custom_call.1} parent=1 // pred_region
      %624 = vsyncadd [#allocation16], 0
      %s626 = sshll.u32 [#allocation15], 4
      %s627 = int_to_ptr.vmem [resolvable:$true] %s626
      %s628 = sshll.u32 %s8, 4
      %s629 = int_to_ptr.hbm [resolvable:$true] %s628
      %631 = dma.vmem_to_hbm [thread:$0]  %s627, 128, %s629, [#allocation16]
    $region65: #{tpu_custom_call.1} parent=1 // pred_fallthru
      _
    // Predicated region
    $region66: #{tpu_custom_call.1} parent=1 // pred_check
      _
    $region67: #{tpu_custom_call.1} parent=1 // pred_check_branch
      %633 = sbr.rel (0) target = $region69
    $region68: #{tpu_custom_call.1} parent=1 // pred_region
      %635 = dma.done [#allocation4], 256
    $region69: #{tpu_custom_call.1} parent=1 // pred_fallthru
      _
    // Predicated region
    $region70: #{tpu_custom_call.1} parent=1 // pred_check
      _
    $region71: #{tpu_custom_call.1} parent=1 // pred_check_branch
      %637 = sbr.rel (0) target = $region73
    $region72: #{tpu_custom_call.1} parent=1 // pred_region
      %639 = dma.done [#allocation16], 128
    $region73: #{tpu_custom_call.1} parent=1 // pred_fallthru
      _
    %640 = vsyncpa [#allocation3], 1
    %641 = vsyncpa [#allocation6], 1
    %642 = vsyncpa [#allocation9], 1
    %643 = vsyncpa [#allocation12], 1
    %644 = vsyncpa [#allocation4], 1
    %645 = vsyncpa [#allocation16], 1

</llo_original>
